<compile_context>
chip_gen: v6e
topology: v6e:2x2x1
jax: 0.10.0
libtpu: 0.0.40
codegen_flags: <defaults>
</compile_context>

<pallas_src>
import functools
import math

import jax
import jax.numpy as jnp
from jax.experimental import pallas as pl
from jax.experimental.pallas import tpu as pltpu

_MASK24 = (1 << 24) - 1  # dropout compares the low 24 bits of each random word


def make_pe_table(d_model: int, max_len: int) -> jnp.ndarray:
    """Sinusoidal positional-encoding table, shape (max_len, d_model)."""
    assert d_model % 2 == 0, "d_model must be even (same limitation as the torch module)"
    position = jnp.arange(max_len, dtype=jnp.float32)[:, None]                  # (max_len, 1)
    div_term = jnp.exp(
        jnp.arange(0, d_model, 2, dtype=jnp.float32) * (-math.log(10000.0) / d_model)
    )                                                                            # (d_model/2,)
    angles = position * div_term                                                 # (max_len, d_model/2)
    pe = jnp.zeros((max_len, d_model), dtype=jnp.float32)
    pe = pe.at[:, 0::2].set(jnp.sin(angles))
    pe = pe.at[:, 1::2].set(jnp.cos(angles))
    return pe


def _round_up(v: int, m: int) -> int:
    return -(-v // m) * m


# --------------------------------------------------------------------------- kernels

def _pe_add_3d_kernel(x_ref, pe_ref, o_ref):
    # x_ref: (tS, B, D); pe_ref: (tS, D) f32, broadcast over batch.
    y = x_ref[...].astype(jnp.float32) + pe_ref[...][:, None, :]
    o_ref[...] = y.astype(o_ref.dtype)


def _pe_add_fold_kernel(x_ref, pe_ref, o_ref, *, batch):
    # x_ref: (tS, B*D); pe_ref: (tS, D) f32, replicated across batch along lanes.
    pe = pe_ref[...]
    pe_b = pe if batch == 1 else jnp.concatenate([pe] * batch, axis=-1)
    o_ref[...] = (x_ref[...].astype(jnp.float32) + pe_b).astype(o_ref.dtype)


def _dropout(y, rng_ref, keep_threshold, inv_keep, in_kernel_rng):
    """Inverted dropout on the f32 block `y` using a 24-bit integer threshold."""
    if in_kernel_rng:
        bits = pltpu.prng_random_bits(y.shape)       # hardware PRNG, no HBM traffic
    else:
        bits = rng_ref[...]                           # host-generated uint32 fallback
    # P(drop) = keep_threshold / 2^24 ~= p; plain Python int constants keep bits' dtype.
    keep = (bits & _MASK24) >= keep_threshold
    return jnp.where(keep, y * inv_keep, 0.0)


def _pe_dropout_3d_kernel(rng_ref, x_ref, pe_ref, o_ref, *,
                          keep_threshold, inv_keep, in_kernel_rng):
    if in_kernel_rng:
        pltpu.prng_seed(rng_ref[0] + pl.program_id(0))   # independent stream per tile
    y = x_ref[...].astype(jnp.float32) + pe_ref[...][:, None, :]
    o_ref[...] = _dropout(y, rng_ref, keep_threshold, inv_keep,
                          in_kernel_rng).astype(o_ref.dtype)


def _pe_dropout_fold_kernel(rng_ref, x_ref, pe_ref, o_ref, *, batch,
                            keep_threshold, inv_keep, in_kernel_rng):
    if in_kernel_rng:
        pltpu.prng_seed(rng_ref[0] + pl.program_id(0))
    pe = pe_ref[...]
    pe_b = pe if batch == 1 else jnp.concatenate([pe] * batch, axis=-1)
    y = x_ref[...].astype(jnp.float32) + pe_b
    o_ref[...] = _dropout(y, rng_ref, keep_threshold, inv_keep,
                          in_kernel_rng).astype(o_ref.dtype)


# --------------------------------------------------------------------------- tiling

def _choose_block_s(S, row_x_bytes, row_out_bytes, row_pe_bytes, row_extra_bytes,
                    *, target_x_bytes=4 << 20, vmem_budget=24 << 20):
    """Sequence-tile size.

    Big enough to amortize the ~0.35us/step pipeline overhead (target ~4 MiB of x per
    tile), small enough that the double-buffered footprint stays inside the scoped VMEM
    budget, and capped so the grid keeps >=2 (preferably even) tiles so v7x's two
    TensorCores both get work.
    """
    denom = 2 * (row_x_bytes + row_out_bytes + row_pe_bytes) + row_extra_bytes
    bs = max(8, target_x_bytes // max(1, row_x_bytes))
    bs = min(bs, max(8, vmem_budget // max(1, denom)))
    bs = min(bs, S)
    if S >= 16:
        bs = min(bs, max(8, (((S + 1) // 2) // 8) * 8))    # keep at least 2 tiles
    if bs < S:
        bs = max(8, (bs // 8) * 8)                         # sublane-aligned tiles
        n_tiles = -(-S // bs)
        if n_tiles > 1 and n_tiles % 2 == 1 and bs > 8:    # prefer an even tile count
            bs_alt = bs - 8
            if (-(-S // bs_alt)) % 2 == 0:
                bs = bs_alt
    return int(bs)


# --------------------------------------------------------------------------- wrapper

def positional_encoding_forward(x, pe_table, *, p: float = 0.1, training: bool = True,
                                seed=None, block_s: int | None = None,
                                use_host_rng: bool = False):
    """dropout(x + pe[:S]) for x of shape (S, B, D); same shape/dtype as x."""
    S, B, D = x.shape
    if not (0.0 <= p < 1.0):
        raise ValueError("dropout p must be in [0, 1)")
    if S > pe_table.shape[0]:
        raise ValueError(f"seq_len {S} exceeds PE table max_len {pe_table.shape[0]}")

    use_dropout = training and p > 0.0
    if use_dropout and seed is None:
        raise ValueError("training-mode dropout requires an explicit integer `seed` "
                         "(a fixed default would reuse the same mask every call)")

    pe_slice = pe_table[:S].astype(jnp.float32)            # (S, D)

    fold = (D % 128 == 0)      # fold batch into lanes -> lane-dense, no sublane padding
    itemsize = jnp.dtype(x.dtype).itemsize
    if fold:
        row_elems_pad = _round_up(B * D, 128)
    else:
        row_elems_pad = _round_up(B, 8) * _round_up(D, 128)
    row_x_bytes = row_elems_pad * itemsize
    row_out_bytes = row_elems_pad * itemsize
    row_pe_bytes = _round_up(D, 128) * 4
    row_extra_bytes = row_elems_pad * (8 if use_dropout else 4)   # f32 y (+ u32 bits)

    if block_s is None:
        block_s = _choose_block_s(S, row_x_bytes, row_out_bytes, row_pe_bytes,
                                  row_extra_bytes)
    grid = (pl.cdiv(S, block_s),)

    if fold:
        x_in = x.reshape(S, B * D)                          # free row-major view
        x_spec = pl.BlockSpec((block_s, B * D), lambda i: (i, 0))
        out_shape = jax.ShapeDtypeStruct((S, B * D), x.dtype)
    else:
        x_in = x
        x_spec = pl.BlockSpec((block_s, B, D), lambda i: (i, 0, 0))
        out_shape = jax.ShapeDtypeStruct((S, B, D), x.dtype)
    pe_spec = pl.BlockSpec((block_s, D), lambda i: (i, 0))

    compiler_params = pltpu.CompilerParams(
        dimension_semantics=("parallel",),                  # shard seq tiles over v7x TCs
        vmem_limit_bytes=32 * 1024 * 1024,                  # lift v5e's 16 MiB default
    )

    if not use_dropout:
        kernel = (functools.partial(_pe_add_fold_kernel, batch=B) if fold
                  else _pe_add_3d_kernel)
        out = pl.pallas_call(
            kernel, out_shape=out_shape, grid=grid,
            in_specs=[x_spec, pe_spec], out_specs=x_spec,
            compiler_params=compiler_params,
        )(x_in, pe_slice)
        return out.reshape(S, B, D)

    keep_threshold = min(int(round(p * float(1 << 24))), (1 << 24) - 1)
    inv_keep = float(1.0 / (1.0 - p))

    def run(in_kernel_rng: bool):
        if fold:
            kernel = functools.partial(_pe_dropout_fold_kernel, batch=B,
                                       keep_threshold=keep_threshold, inv_keep=inv_keep,
                                       in_kernel_rng=in_kernel_rng)
        else:
            kernel = functools.partial(_pe_dropout_3d_kernel,
                                       keep_threshold=keep_threshold, inv_keep=inv_keep,
                                       in_kernel_rng=in_kernel_rng)
        if in_kernel_rng:
            rng_arg = jnp.asarray([seed], dtype=jnp.int32)
            rng_spec = pl.BlockSpec(memory_space=pltpu.MemorySpace.SMEM)
        else:
            # Host-bits fallback: +4 B/elem HBM read vs. the in-kernel hardware PRNG.
            # TODO(synk): switch the fallback to uint8 bytes (feedback #2) once 8-bit
            # compares are verified on all target generations.
            rng_arg = jax.random.bits(jax.random.PRNGKey(int(seed)), x_in.shape,
                                      dtype=jnp.uint32)
            rng_spec = x_spec
        return pl.pallas_call(
            kernel, out_shape=out_shape, grid=grid,
            in_specs=[rng_spec, x_spec, pe_spec], out_specs=x_spec,
            compiler_params=compiler_params,
        )(rng_arg, x_in, pe_slice)

    if use_host_rng:
        out = run(in_kernel_rng=False)
    else:
        try:
            out = run(in_kernel_rng=True)
        except Exception:
            # In-kernel PRNG has no lowering under CPU interpret mode (and may be
            # unavailable on older toolchains) -- fall back to host-generated bits.
            out = run(in_kernel_rng=False)
    return out.reshape(S, B, D)


# --------------------------------------------------------------------------- demo

if __name__ == "__main__":
    key = jax.random.PRNGKey(0)
    k1, k2 = jax.random.split(key)

    def check(seq_len, batch, d_model, max_len, xkey, p=0.1, seed=1234):
        x = jax.random.normal(xkey, (seq_len, batch, d_model), dtype=jnp.float32)
        pe_table = make_pe_table(d_model, max_len)
        ref = x + pe_table[:seq_len][:, None, :]

        # Eval mode (dropout is identity): exact reference check.
        out_eval = positional_encoding_forward(x, pe_table, p=p, training=False)
        out_eval = jax.block_until_ready(out_eval)
        assert out_eval.shape == x.shape
        assert jnp.allclose(out_eval, ref, atol=1e-6), "eval-mode mismatch"

        # Training mode: every element must be 0 (dropped) or (x + pe) / (1 - p).
        out_train = positional_encoding_forward(x, pe_table, p=p, training=True, seed=seed)
        out_train = jax.block_until_ready(out_train)
        assert out_train.shape == x.shape
        scaled = ref / (1.0 - p)
        ok = jnp.isclose(out_train, 0.0, atol=1e-6) | jnp.isclose(
            out_train, scaled, rtol=1e-5, atol=1e-5)
        assert bool(jnp.all(ok)), "training-mode dropout property violated"

    # Module-default shapes (d_model=32 -> (tS, B, D) layout path).
    check(seq_len=8, batch=2, d_model=32, max_len=20, xkey=k1)
    # Lane-folded path (d_model % 128 == 0), multi-tile pipelined grid.
    check(seq_len=16, batch=2, d_model=128, max_len=32, xkey=k2)

    print("KERNEL_OK")
</pallas_src>

<mosaic_0001>
module attributes {stable_mosaic.version = 11 : i64} {
  func.func @_pe_add_3d_kernel(%arg0: i32, %arg1: memref<8x2x32xf32, #tpu.memory_space<vmem>>, %arg2: memref<8x32xf32, #tpu.memory_space<vmem>>, %arg3: memref<8x2x32xf32, #tpu.memory_space<vmem>>) attributes {dimension_semantics = [#tpu.dimension_semantics<parallel>], iteration_bounds = array<i64: 1>, scalar_prefetch = 0 : i64, scratch_operands = 0 : i64, tpu.core_type = #tpu.core_type<tc>, window_params = [{transform_indices = @transform_0, window_bounds = array<i64: 8, 2, 32>}, {transform_indices = @transform_1, window_bounds = array<i64: 8, 32>}, {transform_indices = @transform_2, window_bounds = array<i64: 8, 2, 32>}]} {
    %c0 = arith.constant 0 : index
    %c0_0 = arith.constant 0 : index
    %c0_1 = arith.constant 0 : index
    %0 = vector.load %arg1[%c0, %c0_0, %c0_1] : memref<8x2x32xf32, #tpu.memory_space<vmem>>, vector<8x2x32xf32>
    %c0_2 = arith.constant 0 : index
    %c0_3 = arith.constant 0 : index
    %1 = vector.load %arg2[%c0_2, %c0_3] : memref<8x32xf32, #tpu.memory_space<vmem>>, vector<8x32xf32>
    %2 = vector.shape_cast %1 : vector<8x32xf32> to vector<8x1x32xf32>
    %3 = vector.broadcast %2 : vector<8x1x32xf32> to vector<8x2x32xf32>
    %4 = arith.addf %0, %3 : vector<8x2x32xf32>
    %c0_4 = arith.constant 0 : index
    %c0_5 = arith.constant 0 : index
    %c0_6 = arith.constant 0 : index
    %5 = vector.load %arg3[%c0_4, %c0_5, %c0_6] : memref<8x2x32xf32, #tpu.memory_space<vmem>>, vector<8x2x32xf32>
    tpu.vector_store %arg3[%c0_4, %c0_5, %c0_6], %4 {strides = array<i32>} : memref<8x2x32xf32, #tpu.memory_space<vmem>>, vector<8x2x32xf32>,
    return
  }
  func.func @transform_0(%arg0: i32) -> (i32, i32, i32) {
    %c0_i32 = arith.constant 0 : i32
    %c0_i32_0 = arith.constant 0 : i32
    %c0_i32_1 = arith.constant 0 : i32
    return %arg0, %c0_i32, %c0_i32_0 : i32, i32, i32
  }
  func.func @transform_1(%arg0: i32) -> (i32, i32) {
    %c0_i32 = arith.constant 0 : i32
    %c0_i32_0 = arith.constant 0 : i32
    return %arg0, %c0_i32 : i32, i32
  }
  func.func @transform_2(%arg0: i32) -> (i32, i32, i32) {
    %c0_i32 = arith.constant 0 : i32
    %c0_i32_0 = arith.constant 0 : i32
    %c0_i32_1 = arith.constant 0 : i32
    return %arg0, %c0_i32, %c0_i32_0 : i32, i32, i32
  }
}

</mosaic_0001>

<llo_original>
// kernel: tpu_custom_call.1
$region0: #{tpu_custom_call.1}
  #allocation0 [shape = 'u32[]', space=smem, size = 0x4, offset = 0x4, fixed_abs, tag = 'smem constant byte address 0x4 - core index']
  #allocation1 [shape = 'u32[144,128]{1,0:T(1,128)}', space=vmem, size = 0x12000, scoped, tag = 'internal scratch']
  %s0 = inlined_call_operand.hbm [shape: f32[8,2,32], index: 0, kind: input, shape index: {}]
  %s1 = inlined_call_operand.hbm [shape: f32[8,32], index: 1, kind: input, shape index: {}]
  %s2 = inlined_call_operand.hbm [shape: f32[8,2,32], index: 2, kind: output, shape index: {}]
  %s3 = sld [smem:[#allocation0]]
  $region26: #{tpu_custom_call.1} parent=0
    _
  %s5 = ssub.s32 1, %s3
  %s6 = scalar_select 0, %s5, %s3
  $region1: #{tpu_custom_call.1} parent=0
    #allocation2 [shape = 'u8[8192]{0}', space=vmem, size = 0x2000, scoped, tag = 'input window, operand 0, single buffered']
    #allocation3 [shape = 's32[1]{0}', space=sflag, size = 0x4, scoped, tag = 'scoped memory for tpu_custom_call.1']
    #allocation4 [shape = 's32[1]{0}', space=sflag, size = 0x4, scoped, tag = 'scoped memory for tpu_custom_call.1']
    #allocation5 [shape = 'u8[4096]{0}', space=vmem, size = 0x1000, scoped, tag = 'input window, operand 1, single buffered']
    #allocation6 [shape = 's32[1]{0}', space=sflag, size = 0x4, scoped, tag = 'scoped memory for tpu_custom_call.1']
    #allocation7 [shape = 'u8[8192]{0}', space=vmem, size = 0x2000, scoped, tag = 'output window, operand 0, single buffered']
    %7 = vsyncpa [#allocation3], 0
    %8 = vsyncpa [#allocation6], 0
    %9 = vsyncpa [#allocation4], 0
    // Predicated region
    $region2: #{tpu_custom_call.1} parent=1 // pred_check
      _
    $region3: #{tpu_custom_call.1} parent=1 // pred_check_branch
      %11 = sbr.rel (0) target = $region5
    $region4: #{tpu_custom_call.1} parent=1 // pred_region
      %s13 = ssub.s32 256, 256
      %14 = vsyncadd [#allocation3], %s13
      %s15 = sshll.u32 [#allocation2], 4
      %s16 = int_to_ptr.vmem [resolvable:$true] %s15
      %21 = dma.hbm_to_vmem [thread:$0]  %s0, 256, %s16, [#allocation3], 32, 32, 2
    $region5: #{tpu_custom_call.1} parent=1 // pred_fallthru
      _
    // Predicated region
    $region6: #{tpu_custom_call.1} parent=1 // pred_check
      _
    $region7: #{tpu_custom_call.1} parent=1 // pred_check_branch
      %23 = sbr.rel (0) target = $region9
    $region8: #{tpu_custom_call.1} parent=1 // pred_region
      %s25 = ssub.s32 128, 128
      %26 = vsyncadd [#allocation6], %s25
      %s28 = sshll.u32 [#allocation5], 4
      %s29 = int_to_ptr.vmem [resolvable:$true] %s28
      %31 = dma.hbm_to_vmem [thread:$0]  %s1, 128, %s29, [#allocation6]
    $region9: #{tpu_custom_call.1} parent=1 // pred_fallthru
      _
    // Predicated region
    $region10: #{tpu_custom_call.1} parent=1 // pred_check
      _
    $region11: #{tpu_custom_call.1} parent=1 // pred_check_branch
      %33 = sbr.rel (0) target = $region13
    $region12: #{tpu_custom_call.1} parent=1 // pred_region
      %34 = dma.done [#allocation3], 256
    $region13: #{tpu_custom_call.1} parent=1 // pred_fallthru
      _
    // Predicated region
    $region14: #{tpu_custom_call.1} parent=1 // pred_check
      _
    $region15: #{tpu_custom_call.1} parent=1 // pred_check_branch
      %36 = sbr.rel (0) target = $region17
    $region16: #{tpu_custom_call.1} parent=1 // pred_region
      %37 = dma.done [#allocation6], 128
    $region17: #{tpu_custom_call.1} parent=1 // pred_fallthru
      _
    %v38 = vld [vmem:[#allocation2] sm:$0x3]
    %v39 = vld [vmem:[#allocation2 + $0x2] sm:$0x3]
    %v40 = vld [vmem:[#allocation2 + $0x4] sm:$0x3]
    %v41 = vld [vmem:[#allocation2 + $0x6] sm:$0x3]
    %v42 = vld [vmem:[#allocation2 + $0x8] sm:$0x3]
    %v43 = vld [vmem:[#allocation2 + $0xa] sm:$0x3]
    %v44 = vld [vmem:[#allocation2 + $0xc] sm:$0x3]
    %v45 = vld [vmem:[#allocation2 + $0xe] sm:$0x3]
    %v46 = vld [vmem:[#allocation5] sm:$0xff]
    %v48 = vcombine.high %v46, %v46
    %v50 = vunpack.c.l.s4 1966171168
    %v51 = vunpack.c.0.s8 %v50
    %v52 = vlaneseq
    %v53 = vshrl.u32 %v52, 7
    %v54 = vsub.s32 %v51, %v53
    %v55 = vrot.slane %v46, %v54
    %v57 = vunpack.c.l.s4 1966171168
    %v58 = vunpack.c.0.s8 %v57
    %v59 = vlaneseq
    %v60 = vshrl.u32 %v59, 7
    %v61 = vsub.s32 %v58, %v60
    %v62 = vrot.slane %v48, %v61
    %v63 = vcombine.high %v55, %v55
    %v64 = vcombine.high %v62, %v62
    %v66 = vunpack.c.l.s4 1966171168
    %v67 = vunpack.c.0.s8 %v66
    %v68 = vlaneseq
    %v69 = vshrl.u32 %v68, 7
    %v70 = vsub.s32 %v67, %v69
    %v71 = vrot.slane %v55, %v70
    %v73 = vunpack.c.l.s4 1966171168
    %v74 = vunpack.c.0.s8 %v73
    %v75 = vlaneseq
    %v76 = vshrl.u32 %v75, 7
    %v77 = vsub.s32 %v74, %v76
    %v78 = vrot.slane %v62, %v77
    %v80 = vunpack.c.l.s4 1966171168
    %v81 = vunpack.c.0.s8 %v80
    %v82 = vlaneseq
    %v83 = vshrl.u32 %v82, 7
    %v84 = vsub.s32 %v81, %v83
    %v85 = vrot.slane %v63, %v84
    %v87 = vunpack.c.l.s4 1966171168
    %v88 = vunpack.c.0.s8 %v87
    %v89 = vlaneseq
    %v90 = vshrl.u32 %v89, 7
    %v91 = vsub.s32 %v88, %v90
    %v92 = vrot.slane %v64, %v91
    %v93 = vcombine.high %v71, %v71
    %v94 = vcombine.high %v78, %v78
    %v95 = vcombine.high %v85, %v85
    %v96 = vcombine.high %v92, %v92
    %v97 = vlaneseq
    %v98 = vshrl.u32 %v97, 7
    %v99 = vsub.s32 0, %v98
    %v100 = vrot.slane %v71, %v99
    %v101 = vlaneseq
    %v102 = vshrl.u32 %v101, 7
    %v103 = vsub.s32 0, %v102
    %v104 = vrot.slane %v85, %v103
    %v105 = vlaneseq
    %v106 = vshrl.u32 %v105, 7
    %v107 = vsub.s32 0, %v106
    %v108 = vrot.slane %v93, %v107
    %v109 = vlaneseq
    %v110 = vshrl.u32 %v109, 7
    %v111 = vsub.s32 0, %v110
    %v112 = vrot.slane %v95, %v111
    %v113 = vlaneseq
    %v114 = vshrl.u32 %v113, 7
    %v115 = vsub.s32 0, %v114
    %v116 = vrot.slane %v78, %v115
    %v117 = vlaneseq
    %v118 = vshrl.u32 %v117, 7
    %v119 = vsub.s32 0, %v118
    %v120 = vrot.slane %v92, %v119
    %v121 = vlaneseq
    %v122 = vshrl.u32 %v121, 7
    %v123 = vsub.s32 0, %v122
    %v124 = vrot.slane %v94, %v123
    %v125 = vlaneseq
    %v126 = vshrl.u32 %v125, 7
    %v127 = vsub.s32 0, %v126
    %v128 = vrot.slane %v96, %v127
    %v137 = vadd.f32 %v38, %v100
    %v138 = vadd.f32 %v39, %v104
    %v139 = vadd.f32 %v40, %v108
    %v140 = vadd.f32 %v41, %v112
    %v141 = vadd.f32 %v42, %v116
    %v142 = vadd.f32 %v43, %v120
    %v143 = vadd.f32 %v44, %v124
    %v144 = vadd.f32 %v45, %v128
    %vm145 = vcmask 254976
    %146 = vst.msk [vmem:[#allocation7] sm:$0x3] %vm145, %v137
    %147 = vst.msk [vmem:[#allocation7 + $0x2] sm:$0x3] %vm145, %v138
    %148 = vst.msk [vmem:[#allocation7 + $0x4] sm:$0x3] %vm145, %v139
    %149 = vst.msk [vmem:[#allocation7 + $0x6] sm:$0x3] %vm145, %v140
    %150 = vst.msk [vmem:[#allocation7 + $0x8] sm:$0x3] %vm145, %v141
    %151 = vst.msk [vmem:[#allocation7 + $0xa] sm:$0x3] %vm145, %v142
    %152 = vst.msk [vmem:[#allocation7 + $0xc] sm:$0x3] %vm145, %v143
    %153 = vst.msk [vmem:[#allocation7 + $0xe] sm:$0x3] %vm145, %v144
    // Predicated region
    $region18: #{tpu_custom_call.1} parent=1 // pred_check
      _
    $region19: #{tpu_custom_call.1} parent=1 // pred_check_branch
      %155 = sbr.rel (0) target = $region21
    $region20: #{tpu_custom_call.1} parent=1 // pred_region
      %s157 = ssub.s32 256, 256
      %158 = vsyncadd [#allocation4], %s157
      %s159 = sshll.u32 [#allocation7], 4
      %s160 = int_to_ptr.vmem [resolvable:$true] %s159
      %165 = dma.vmem_to_hbm [thread:$0]  %s160, 256, %s2, [#allocation4], 32, 32, 2
    $region21: #{tpu_custom_call.1} parent=1 // pred_fallthru
      _
    // Predicated region
    $region22: #{tpu_custom_call.1} parent=1 // pred_check
      _
    $region23: #{tpu_custom_call.1} parent=1 // pred_check_branch
      %167 = sbr.rel (0) target = $region25
    $region24: #{tpu_custom_call.1} parent=1 // pred_region
      %168 = dma.done [#allocation4], 256
    $region25: #{tpu_custom_call.1} parent=1 // pred_fallthru
      _
    %169 = vsyncpa [#allocation3], 1
    %170 = vsyncpa [#allocation6], 1
    %171 = vsyncpa [#allocation4], 1

</llo_original>
